<compile_context>
chip_gen: v6e
topology: v6e:2x2x1
jax: 0.10.0
libtpu: 0.0.40
codegen_flags: <defaults>
</compile_context>

<pallas_src>
import jax
import jax.numpy as jnp
from jax import lax
from jax.experimental import pallas as pl
from jax.experimental.pallas import tpu as pltpu


def _pick_vmem_limit_bytes():
    """Generation-aware scoped-VMEM limit (v5e/v6e: 128 MiB phys, v7x: 64 MiB)."""
    try:
        cap = pltpu.get_tpu_info().vmem_capacity_bytes
    except Exception:  # pragma: no cover - fallback if introspection unavailable
        cap = 128 * 1024 * 1024
    return int(min(64 * 1024 * 1024, cap // 2))


def _ffnn_kernel(tokens_ref,                # SMEM (B_pad, S) int32 (scalar prefetch)
                 emb_ref,                   # VMEM (V, E) f32, resident
                 w1_ref, b1_ref,            # (E, H1) bf16 / (1, H1) f32, resident
                 w2_ref, b2_ref,            # (H1, H2) bf16 / (1, H2) f32, resident
                 w3_ref, b3_ref,            # (H2, tile_v) bf16 / (1, tile_v) f32
                 out_ref,                   # (tile_b, tile_v) f32
                 h2_ref):                   # VMEM scratch (tile_b, H2) f32
    bi = pl.program_id(0)
    tile_b = out_ref.shape[0]
    S = tokens_ref.shape[1]
    E = emb_ref.shape[1]

    # Everything up to h2 is independent of the V tile: compute it once per
    # B-tile on the first V step and keep it resident in VMEM scratch.
    @pl.when(pl.program_id(1) == 0)
    def _():
        inv_s = 1.0 / S  # applied in f32 -> exact PyTorch mean semantics for any S

        # Embedding gather + mean-pool from scalar-prefetched tokens.
        rows = []
        for b in range(tile_b):  # static unroll; tile_b is small
            def body(s, acc, _b=b):
                tok = tokens_ref[bi * tile_b + _b, s]
                return acc + emb_ref[pl.ds(tok, 1), :]          # (1, E) f32 row
            rows.append(lax.fori_loop(0, S, body,
                                      jnp.zeros((1, E), jnp.float32)))
        x = jnp.concatenate(rows, axis=0) * inv_s               # (tile_b, E) f32

        # fc1 + ReLU (bf16 operands, f32 accumulate, f32 bias/ReLU)
        h1 = jnp.dot(x.astype(jnp.bfloat16), w1_ref[...],
                     preferred_element_type=jnp.float32)        # (tile_b, H1)
        h1 = jnp.maximum(h1 + b1_ref[...], 0.0)

        # fc2 + ReLU
        h2 = jnp.dot(h1.astype(jnp.bfloat16), w2_ref[...],
                     preferred_element_type=jnp.float32)        # (tile_b, H2)
        h2_ref[...] = jnp.maximum(h2 + b2_ref[...], 0.0)

    # Output projection for this (B-tile, V-tile) — lane-dense V tile.
    out = jnp.dot(h2_ref[...].astype(jnp.bfloat16), w3_ref[...],
                  preferred_element_type=jnp.float32)           # (tile_b, tile_v)
    out_ref[...] = (out + b3_ref[...]).astype(out_ref.dtype)


def feed_forward_nn(tokens, params, *, tile_b=8, tile_v=128):
    """Forward pass of FeedForwardNN.

    Args:
      tokens: int array of shape (B, S)
      params: dict with 'emb' (V,E) f32, 'w1' (E,H1) bf16, 'b1' (1,H1) f32,
              'w2' (H1,H2) bf16, 'b2' (1,H2) f32, 'w3' (H2,V) bf16,
              'b3' (1,V) f32   (linear weights stored transposed: y = x @ W + b)
    Returns:
      logits of shape (B, V), float32
    """
    B, S = tokens.shape
    V, E = params["emb"].shape
    H1 = params["w1"].shape[1]
    H2 = params["w2"].shape[1]
    assert V % tile_v == 0 and tile_v % 128 == 0, "V tile must be lane-dense"

    # Pad B up to a multiple of tile_b (padded rows gather token 0, sliced off).
    b_pad = pl.cdiv(B, tile_b) * tile_b
    tokens = tokens.astype(jnp.int32)
    if b_pad != B:
        tokens = jnp.pad(tokens, ((0, b_pad - B), (0, 0)))

    nb = b_pad // tile_b
    nv = V // tile_v

    const = lambda bi, vi, tok: (0, 0)          # resident operands
    vtile = lambda bi, vi, tok: (0, vi)         # V-tiled operands

    grid_spec = pltpu.PrefetchScalarGridSpec(
        num_scalar_prefetch=1,
        grid=(nb, nv),
        in_specs=[
            pl.BlockSpec((V, E), const),          # emb (resident, f32 for gather)
            pl.BlockSpec((E, H1), const),         # w1
            pl.BlockSpec((1, H1), const),         # b1
            pl.BlockSpec((H1, H2), const),        # w2
            pl.BlockSpec((1, H2), const),         # b2
            pl.BlockSpec((H2, tile_v), vtile),    # w3 (V-tiled)
            pl.BlockSpec((1, tile_v), vtile),     # b3 (V-tiled)
        ],
        out_specs=pl.BlockSpec((tile_b, tile_v), lambda bi, vi, tok: (bi, vi)),
        scratch_shapes=[pltpu.VMEM((tile_b, H2), jnp.float32)],
    )

    flops = 2 * b_pad * (E * H1 + H1 * H2 + H2 * V) + 2 * b_pad * S * E
    bytes_accessed = (
        V * E * 4                                   # emb table (f32)
        + (E * H1 + H1 * H2 + H2 * V) * 2           # bf16 weights
        + (H1 + H2 + V) * 4                         # f32 biases
        + b_pad * S * 4                             # tokens
        + b_pad * V * 4                             # f32 logits
    )
    cost = pl.CostEstimate(flops=flops, transcendentals=0,
                           bytes_accessed=bytes_accessed)

    out = pl.pallas_call(
        _ffnn_kernel,
        out_shape=jax.ShapeDtypeStruct((b_pad, V), jnp.float32),
        grid_spec=grid_spec,
        cost_estimate=cost,
        compiler_params=pltpu.CompilerParams(
            dimension_semantics=("parallel", "arbitrary"),
            vmem_limit_bytes=_pick_vmem_limit_bytes()),
    )(tokens, params["emb"], params["w1"], params["b1"],
      params["w2"], params["b2"], params["w3"], params["b3"])
    return out[:B]


def init_params(key, vocab_size, embedding_dim, hidden_dims):
    """Matches FeedForwardNN.init_weights: weights ~ N(0, 0.01), biases = 0.
    Linear weights stored bf16 (MXU operand dtype); emb + biases stay f32."""
    k_emb, k1, k2, k3 = jax.random.split(key, 4)
    h1, h2 = hidden_dims
    std = 0.01
    f32 = jnp.float32
    return {
        "emb": std * jax.random.normal(k_emb, (vocab_size, embedding_dim), f32),
        "w1": (std * jax.random.normal(k1, (embedding_dim, h1), f32)).astype(jnp.bfloat16),
        "b1": jnp.zeros((1, h1), f32),
        "w2": (std * jax.random.normal(k2, (h1, h2), f32)).astype(jnp.bfloat16),
        "b2": jnp.zeros((1, h2), f32),
        "w3": (std * jax.random.normal(k3, (h2, vocab_size), f32)).astype(jnp.bfloat16),
        "b3": jnp.zeros((1, vocab_size), f32),
    }


def _reference_mirrored(tokens, params):
    """Pure-JAX reference mirroring the kernel's f32-pool / bf16-matmul math."""
    x = jnp.take(params["emb"], tokens, axis=0).mean(axis=1)               # (B, E) f32
    h1 = jnp.maximum(jnp.dot(x.astype(jnp.bfloat16), params["w1"],
                             preferred_element_type=jnp.float32) + params["b1"], 0.0)
    h2 = jnp.maximum(jnp.dot(h1.astype(jnp.bfloat16), params["w2"],
                             preferred_element_type=jnp.float32) + params["b2"], 0.0)
    return jnp.dot(h2.astype(jnp.bfloat16), params["w3"],
                   preferred_element_type=jnp.float32) + params["b3"]


def _reference_f32(tokens, params):
    """PyTorch-semantics reference (gather + mean + f32 matmuls)."""
    x = jnp.take(params["emb"], tokens, axis=0).mean(axis=1)
    x = jnp.maximum(x @ params["w1"].astype(jnp.float32) + params["b1"], 0.0)
    x = jnp.maximum(x @ params["w2"].astype(jnp.float32) + params["b2"], 0.0)
    return x @ params["w3"].astype(jnp.float32) + params["b3"]


if __name__ == "__main__":
    VOCAB_SIZE = 256            # lane-dense (multiple of 128)
    EMBEDDING_DIM = 128
    FFNN_HIDDEN_DIMS = (256, 128)
    BATCH, SEQ = 16, 12         # SEQ not a power of two: exercises exact f32 1/S

    key = jax.random.PRNGKey(0)
    k_params, k_tokens = jax.random.split(key)

    params = init_params(k_params, VOCAB_SIZE, EMBEDDING_DIM, FFNN_HIDDEN_DIMS)
    tokens = jax.random.randint(k_tokens, (BATCH, SEQ), 0, VOCAB_SIZE,
                                dtype=jnp.int32)

    # 2 B-tiles (parallel) x 2 V-tiles (arbitrary) -> exercises the grid; the
    # parallel B axis lets v7x's second TensorCore take half the batch.
    logits = feed_forward_nn(tokens, params, tile_b=8, tile_v=128)
    logits = jax.block_until_ready(logits)
    assert logits.shape == (BATCH, VOCAB_SIZE), logits.shape

    # rtol-style check vs a reference mirroring the kernel's bf16/f32 math
    # (accumulation order differs per MXU generation, so no tight atol).
    ref_b = _reference_mirrored(tokens, params)
    max_ref = float(jnp.max(jnp.abs(ref_b)))
    max_err = float(jnp.max(jnp.abs(logits - ref_b)))
    assert max_err <= 5e-3 * max_ref + 1e-7, (
        f"mismatch vs bf16-mirrored reference: err={max_err}, scale={max_ref}")

    # Loose semantic check against the full-f32 PyTorch-style forward.
    ref_f = _reference_f32(tokens, params)
    max_ref_f = float(jnp.max(jnp.abs(ref_f)))
    max_err_f = float(jnp.max(jnp.abs(logits - ref_f)))
    assert max_err_f <= 5e-2 * max_ref_f + 1e-7, (
        f"mismatch vs f32 reference: err={max_err_f}, scale={max_ref_f}")

    print("KERNEL_OK")
</pallas_src>

<mosaic_0001>
module attributes {stable_mosaic.version = 11 : i64} {
  func.func @_ffnn_kernel(%arg0: i32, %arg1: i32, %arg2: memref<16x12xi32, #tpu.memory_space<smem>>, %arg3: memref<256x128xf32, #tpu.memory_space<vmem>>, %arg4: memref<128x256xbf16, #tpu.memory_space<vmem>>, %arg5: memref<1x256xf32, #tpu.memory_space<vmem>>, %arg6: memref<256x128xbf16, #tpu.memory_space<vmem>>, %arg7: memref<1x128xf32, #tpu.memory_space<vmem>>, %arg8: memref<128x128xbf16, #tpu.memory_space<vmem>>, %arg9: memref<1x128xf32, #tpu.memory_space<vmem>>, %arg10: memref<8x128xf32, #tpu.memory_space<vmem>>, %arg11: memref<8x128xf32, #tpu.memory_space<vmem>>) attributes {dimension_semantics = [#tpu.dimension_semantics<parallel>, #tpu.dimension_semantics<arbitrary>], iteration_bounds = array<i64: 2, 2>, scalar_prefetch = 1 : i64, scratch_operands = 1 : i64, tpu.core_type = #tpu.core_type<tc>, window_params = [{pipeline_mode = #tpu.pipeline_mode<synchronous>, transform_indices = @transform_0, window_bounds = array<i64: 256, 128>}, {pipeline_mode = #tpu.pipeline_mode<synchronous>, transform_indices = @transform_1, window_bounds = array<i64: 128, 256>}, {pipeline_mode = #tpu.pipeline_mode<synchronous>, transform_indices = @transform_2, window_bounds = array<i64: 1, 256>}, {pipeline_mode = #tpu.pipeline_mode<synchronous>, transform_indices = @transform_3, window_bounds = array<i64: 256, 128>}, {pipeline_mode = #tpu.pipeline_mode<synchronous>, transform_indices = @transform_4, window_bounds = array<i64: 1, 128>}, {transform_indices = @transform_5, window_bounds = array<i64: 128, 128>}, {transform_indices = @transform_6, window_bounds = array<i64: 1, 128>}, {transform_indices = @transform_7, window_bounds = array<i64: 8, 128>}]} {
    %c0_i32 = arith.constant 0 : i32
    %0 = arith.cmpi eq, %arg1, %c0_i32 : i32
    %1 = arith.extui %0 : i1 to i32
    %c0_i32_0 = arith.constant 0 : i32
    %2 = arith.cmpi ne, %1, %c0_i32_0 : i32
    scf.if %2 {
      %cst_8 = arith.constant 0.000000e+00 : f32
      %11 = vector.broadcast %cst_8 : f32 to vector<1x128xf32>
      %c0_i32_9 = arith.constant 0 : i32
      %c12_i32 = arith.constant 12 : i32
      %12 = arith.addi %c0_i32_9, %c12_i32 : i32
      %c1_i32 = arith.constant 1 : i32
      %13 = scf.for %arg12 = %c0_i32_9 to %12 step %c1_i32 iter_args(%arg13 = %11) -> (vector<1x128xf32>)  : i32 {
        %c8_i32 = arith.constant 8 : i32
        %55 = arith.muli %arg0, %c8_i32 : i32
        %c0_i32_61 = arith.constant 0 : i32
        %56 = arith.addi %55, %c0_i32_61 : i32
        %57 = arith.index_cast %56 : i32 to index
        %58 = arith.index_cast %arg12 : i32 to index
        %59 = memref.load %arg2[%57, %58] : memref<16x12xi32, #tpu.memory_space<smem>>
        %60 = arith.index_cast %59 : i32 to index
        %c0_62 = arith.constant 0 : index
        %61 = vector.load %arg3[%60, %c0_62] : memref<256x128xf32, #tpu.memory_space<vmem>>, vector<1x128xf32>
        %62 = arith.addf %arg13, %61 : vector<1x128xf32>
        scf.yield %62 : vector<1x128xf32>
      }
      %c12_i32_10 = arith.constant 12 : i32
      %cst_11 = arith.constant 0.000000e+00 : f32
      %14 = vector.broadcast %cst_11 : f32 to vector<1x128xf32>
      %c0_i32_12 = arith.constant 0 : i32
      %c12_i32_13 = arith.constant 12 : i32
      %15 = arith.addi %c0_i32_12, %c12_i32_13 : i32
      %c1_i32_14 = arith.constant 1 : i32
      %16 = scf.for %arg12 = %c0_i32_12 to %15 step %c1_i32_14 iter_args(%arg13 = %14) -> (vector<1x128xf32>)  : i32 {
        %c8_i32 = arith.constant 8 : i32
        %55 = arith.muli %arg0, %c8_i32 : i32
        %c1_i32_61 = arith.constant 1 : i32
        %56 = arith.addi %55, %c1_i32_61 : i32
        %57 = arith.index_cast %56 : i32 to index
        %58 = arith.index_cast %arg12 : i32 to index
        %59 = memref.load %arg2[%57, %58] : memref<16x12xi32, #tpu.memory_space<smem>>
        %60 = arith.index_cast %59 : i32 to index
        %c0_62 = arith.constant 0 : index
        %61 = vector.load %arg3[%60, %c0_62] : memref<256x128xf32, #tpu.memory_space<vmem>>, vector<1x128xf32>
        %62 = arith.addf %arg13, %61 : vector<1x128xf32>
        scf.yield %62 : vector<1x128xf32>
      }
      %c12_i32_15 = arith.constant 12 : i32
      %cst_16 = arith.constant 0.000000e+00 : f32
      %17 = vector.broadcast %cst_16 : f32 to vector<1x128xf32>
      %c0_i32_17 = arith.constant 0 : i32
      %c12_i32_18 = arith.constant 12 : i32
      %18 = arith.addi %c0_i32_17, %c12_i32_18 : i32
      %c1_i32_19 = arith.constant 1 : i32
      %19 = scf.for %arg12 = %c0_i32_17 to %18 step %c1_i32_19 iter_args(%arg13 = %17) -> (vector<1x128xf32>)  : i32 {
        %c8_i32 = arith.constant 8 : i32
        %55 = arith.muli %arg0, %c8_i32 : i32
        %c2_i32 = arith.constant 2 : i32
        %56 = arith.addi %55, %c2_i32 : i32
        %57 = arith.index_cast %56 : i32 to index
        %58 = arith.index_cast %arg12 : i32 to index
        %59 = memref.load %arg2[%57, %58] : memref<16x12xi32, #tpu.memory_space<smem>>
        %60 = arith.index_cast %59 : i32 to index
        %c0_61 = arith.constant 0 : index
        %61 = vector.load %arg3[%60, %c0_61] : memref<256x128xf32, #tpu.memory_space<vmem>>, vector<1x128xf32>
        %62 = arith.addf %arg13, %61 : vector<1x128xf32>
        scf.yield %62 : vector<1x128xf32>
      }
      %c12_i32_20 = arith.constant 12 : i32
      %cst_21 = arith.constant 0.000000e+00 : f32
      %20 = vector.broadcast %cst_21 : f32 to vector<1x128xf32>
      %c0_i32_22 = arith.constant 0 : i32
      %c12_i32_23 = arith.constant 12 : i32
      %21 = arith.addi %c0_i32_22, %c12_i32_23 : i32
      %c1_i32_24 = arith.constant 1 : i32
      %22 = scf.for %arg12 = %c0_i32_22 to %21 step %c1_i32_24 iter_args(%arg13 = %20) -> (vector<1x128xf32>)  : i32 {
        %c8_i32 = arith.constant 8 : i32
        %55 = arith.muli %arg0, %c8_i32 : i32
        %c3_i32 = arith.constant 3 : i32
        %56 = arith.addi %55, %c3_i32 : i32
        %57 = arith.index_cast %56 : i32 to index
        %58 = arith.index_cast %arg12 : i32 to index
        %59 = memref.load %arg2[%57, %58] : memref<16x12xi32, #tpu.memory_space<smem>>
        %60 = arith.index_cast %59 : i32 to index
        %c0_61 = arith.constant 0 : index
        %61 = vector.load %arg3[%60, %c0_61] : memref<256x128xf32, #tpu.memory_space<vmem>>, vector<1x128xf32>
        %62 = arith.addf %arg13, %61 : vector<1x128xf32>
        scf.yield %62 : vector<1x128xf32>
      }
      %c12_i32_25 = arith.constant 12 : i32
      %cst_26 = arith.constant 0.000000e+00 : f32
      %23 = vector.broadcast %cst_26 : f32 to vector<1x128xf32>
      %c0_i32_27 = arith.constant 0 : i32
      %c12_i32_28 = arith.constant 12 : i32
      %24 = arith.addi %c0_i32_27, %c12_i32_28 : i32
      %c1_i32_29 = arith.constant 1 : i32
      %25 = scf.for %arg12 = %c0_i32_27 to %24 step %c1_i32_29 iter_args(%arg13 = %23) -> (vector<1x128xf32>)  : i32 {
        %c8_i32 = arith.constant 8 : i32
        %55 = arith.muli %arg0, %c8_i32 : i32
        %c4_i32 = arith.constant 4 : i32
        %56 = arith.addi %55, %c4_i32 : i32
        %57 = arith.index_cast %56 : i32 to index
        %58 = arith.index_cast %arg12 : i32 to index
        %59 = memref.load %arg2[%57, %58] : memref<16x12xi32, #tpu.memory_space<smem>>
        %60 = arith.index_cast %59 : i32 to index
        %c0_61 = arith.constant 0 : index
        %61 = vector.load %arg3[%60, %c0_61] : memref<256x128xf32, #tpu.memory_space<vmem>>, vector<1x128xf32>
        %62 = arith.addf %arg13, %61 : vector<1x128xf32>
        scf.yield %62 : vector<1x128xf32>
      }
      %c12_i32_30 = arith.constant 12 : i32
      %cst_31 = arith.constant 0.000000e+00 : f32
      %26 = vector.broadcast %cst_31 : f32 to vector<1x128xf32>
      %c0_i32_32 = arith.constant 0 : i32
      %c12_i32_33 = arith.constant 12 : i32
      %27 = arith.addi %c0_i32_32, %c12_i32_33 : i32
      %c1_i32_34 = arith.constant 1 : i32
      %28 = scf.for %arg12 = %c0_i32_32 to %27 step %c1_i32_34 iter_args(%arg13 = %26) -> (vector<1x128xf32>)  : i32 {
        %c8_i32 = arith.constant 8 : i32
        %55 = arith.muli %arg0, %c8_i32 : i32
        %c5_i32 = arith.constant 5 : i32
        %56 = arith.addi %55, %c5_i32 : i32
        %57 = arith.index_cast %56 : i32 to index
        %58 = arith.index_cast %arg12 : i32 to index
        %59 = memref.load %arg2[%57, %58] : memref<16x12xi32, #tpu.memory_space<smem>>
        %60 = arith.index_cast %59 : i32 to index
        %c0_61 = arith.constant 0 : index
        %61 = vector.load %arg3[%60, %c0_61] : memref<256x128xf32, #tpu.memory_space<vmem>>, vector<1x128xf32>
        %62 = arith.addf %arg13, %61 : vector<1x128xf32>
        scf.yield %62 : vector<1x128xf32>
      }
      %c12_i32_35 = arith.constant 12 : i32
      %cst_36 = arith.constant 0.000000e+00 : f32
      %29 = vector.broadcast %cst_36 : f32 to vector<1x128xf32>
      %c0_i32_37 = arith.constant 0 : i32
      %c12_i32_38 = arith.constant 12 : i32
      %30 = arith.addi %c0_i32_37, %c12_i32_38 : i32
      %c1_i32_39 = arith.constant 1 : i32
      %31 = scf.for %arg12 = %c0_i32_37 to %30 step %c1_i32_39 iter_args(%arg13 = %29) -> (vector<1x128xf32>)  : i32 {
        %c8_i32 = arith.constant 8 : i32
        %55 = arith.muli %arg0, %c8_i32 : i32
        %c6_i32 = arith.constant 6 : i32
        %56 = arith.addi %55, %c6_i32 : i32
        %57 = arith.index_cast %56 : i32 to index
        %58 = arith.index_cast %arg12 : i32 to index
        %59 = memref.load %arg2[%57, %58] : memref<16x12xi32, #tpu.memory_space<smem>>
        %60 = arith.index_cast %59 : i32 to index
        %c0_61 = arith.constant 0 : index
        %61 = vector.load %arg3[%60, %c0_61] : memref<256x128xf32, #tpu.memory_space<vmem>>, vector<1x128xf32>
        %62 = arith.addf %arg13, %61 : vector<1x128xf32>
        scf.yield %62 : vector<1x128xf32>
      }
      %c12_i32_40 = arith.constant 12 : i32
      %cst_41 = arith.constant 0.000000e+00 : f32
      %32 = vector.broadcast %cst_41 : f32 to vector<1x128xf32>
      %c0_i32_42 = arith.constant 0 : i32
      %c12_i32_43 = arith.constant 12 : i32
      %33 = arith.addi %c0_i32_42, %c12_i32_43 : i32
      %c1_i32_44 = arith.constant 1 : i32
      %34 = scf.for %arg12 = %c0_i32_42 to %33 step %c1_i32_44 iter_args(%arg13 = %32) -> (vector<1x128xf32>)  : i32 {
        %c8_i32 = arith.constant 8 : i32
        %55 = arith.muli %arg0, %c8_i32 : i32
        %c7_i32 = arith.constant 7 : i32
        %56 = arith.addi %55, %c7_i32 : i32
        %57 = arith.index_cast %56 : i32 to index
        %58 = arith.index_cast %arg12 : i32 to index
        %59 = memref.load %arg2[%57, %58] : memref<16x12xi32, #tpu.memory_space<smem>>
        %60 = arith.index_cast %59 : i32 to index
        %c0_61 = arith.constant 0 : index
        %61 = vector.load %arg3[%60, %c0_61] : memref<256x128xf32, #tpu.memory_space<vmem>>, vector<1x128xf32>
        %62 = arith.addf %arg13, %61 : vector<1x128xf32>
        scf.yield %62 : vector<1x128xf32>
      }
      %c12_i32_45 = arith.constant 12 : i32
      %35 = tpu.concatenate %13, %16, %19, %22, %25, %28, %31, %34 in 0 : vector<1x128xf32>, vector<1x128xf32>, vector<1x128xf32>, vector<1x128xf32>, vector<1x128xf32>, vector<1x128xf32>, vector<1x128xf32>, vector<1x128xf32> -> vector<8x128xf32>
      %cst_46 = arith.constant 0.0833333358 : f32
      %36 = vector.broadcast %cst_46 : f32 to vector<8x128xf32>
      %37 = arith.mulf %35, %36 : vector<8x128xf32>
      %38 = arith.truncf %37 : vector<8x128xf32> to vector<8x128xbf16>
      %c0_47 = arith.constant 0 : index
      %c0_48 = arith.constant 0 : index
      %39 = vector.load %arg4[%c0_47, %c0_48] : memref<128x256xbf16, #tpu.memory_space<vmem>>, vector<128x256xbf16>
      %cst_49 = arith.constant dense<0.000000e+00> : vector<8x256xf32>
      %40 = tpu.matmul %38, %39, %cst_49 {dimension_numbers = #tpu.dot_dimension_numbers<[1], [0], [0], [1], [0, 0, 1, 1], [], []>} : vector<8x128xbf16>, vector<128x256xbf16>, vector<8x256xf32> -> vector<8x256xf32>
      %c0_50 = arith.constant 0 : index
      %c0_51 = arith.constant 0 : index
      %41 = vector.load %arg5[%c0_50, %c0_51] : memref<1x256xf32, #tpu.memory_space<vmem>>, vector<1x256xf32>
      %42 = vector.broadcast %41 : vector<1x256xf32> to vector<8x256xf32>
      %43 = arith.addf %40, %42 : vector<8x256xf32>
      %cst_52 = arith.constant 0.000000e+00 : f32
      %44 = vector.broadcast %cst_52 : f32 to vector<8x256xf32>
      %45 = arith.maximumf %43, %44 : vector<8x256xf32>
      %46 = arith.truncf %45 : vector<8x256xf32> to vector<8x256xbf16>
      %c0_53 = arith.constant 0 : index
      %c0_54 = arith.constant 0 : index
      %47 = vector.load %arg6[%c0_53, %c0_54] : memref<256x128xbf16, #tpu.memory_space<vmem>>, vector<256x128xbf16>
      %cst_55 = arith.constant dense<0.000000e+00> : vector<8x128xf32>
      %48 = tpu.matmul %46, %47, %cst_55 {dimension_numbers = #tpu.dot_dimension_numbers<[1], [0], [0], [1], [0, 0, 1, 1], [], []>} : vector<8x256xbf16>, vector<256x128xbf16>, vector<8x128xf32> -> vector<8x128xf32>
      %c0_56 = arith.constant 0 : index
      %c0_57 = arith.constant 0 : index
      %49 = vector.load %arg7[%c0_56, %c0_57] : memref<1x128xf32, #tpu.memory_space<vmem>>, vector<1x128xf32>
      %50 = vector.broadcast %49 : vector<1x128xf32> to vector<8x128xf32>
      %51 = arith.addf %48, %50 : vector<8x128xf32>
      %cst_58 = arith.constant 0.000000e+00 : f32
      %52 = vector.broadcast %cst_58 : f32 to vector<8x128xf32>
      %53 = arith.maximumf %51, %52 : vector<8x128xf32>
      %c0_59 = arith.constant 0 : index
      %c0_60 = arith.constant 0 : index
      %54 = vector.load %arg11[%c0_59, %c0_60] : memref<8x128xf32, #tpu.memory_space<vmem>>, vector<8x128xf32>
      tpu.vector_store %arg11[%c0_59, %c0_60], %53 {strides = array<i32>} : memref<8x128xf32, #tpu.memory_space<vmem>>, vector<8x128xf32>,
    } else {
    }
    %c0 = arith.constant 0 : index
    %c0_1 = arith.constant 0 : index
    %3 = vector.load %arg11[%c0, %c0_1] : memref<8x128xf32, #tpu.memory_space<vmem>>, vector<8x128xf32>
    %4 = arith.truncf %3 : vector<8x128xf32> to vector<8x128xbf16>
    %c0_2 = arith.constant 0 : index
    %c0_3 = arith.constant 0 : index
    %5 = vector.load %arg8[%c0_2, %c0_3] : memref<128x128xbf16, #tpu.memory_space<vmem>>, vector<128x128xbf16>
    %cst = arith.constant dense<0.000000e+00> : vector<8x128xf32>
    %6 = tpu.matmul %4, %5, %cst {dimension_numbers = #tpu.dot_dimension_numbers<[1], [0], [0], [1], [0, 0, 1, 1], [], []>} : vector<8x128xbf16>, vector<128x128xbf16>, vector<8x128xf32> -> vector<8x128xf32>
    %c0_4 = arith.constant 0 : index
    %c0_5 = arith.constant 0 : index
    %7 = vector.load %arg9[%c0_4, %c0_5] : memref<1x128xf32, #tpu.memory_space<vmem>>, vector<1x128xf32>
    %8 = vector.broadcast %7 : vector<1x128xf32> to vector<8x128xf32>
    %9 = arith.addf %6, %8 : vector<8x128xf32>
    %c0_6 = arith.constant 0 : index
    %c0_7 = arith.constant 0 : index
    %10 = vector.load %arg10[%c0_6, %c0_7] : memref<8x128xf32, #tpu.memory_space<vmem>>, vector<8x128xf32>
    tpu.vector_store %arg10[%c0_6, %c0_7], %9 {strides = array<i32>} : memref<8x128xf32, #tpu.memory_space<vmem>>, vector<8x128xf32>,
    return
  }
  func.func @transform_0(%arg0: i32, %arg1: i32, %arg2: memref<16x12xi32, #tpu.memory_space<smem>>) -> (i32, i32) {
    %c0_i32 = arith.constant 0 : i32
    %c0_i32_0 = arith.constant 0 : i32
    %c0_i32_1 = arith.constant 0 : i32
    return %c0_i32, %c0_i32_0 : i32, i32
  }
  func.func @transform_1(%arg0: i32, %arg1: i32, %arg2: memref<16x12xi32, #tpu.memory_space<smem>>) -> (i32, i32) {
    %c0_i32 = arith.constant 0 : i32
    %c0_i32_0 = arith.constant 0 : i32
    %c0_i32_1 = arith.constant 0 : i32
    return %c0_i32, %c0_i32_0 : i32, i32
  }
  func.func @transform_2(%arg0: i32, %arg1: i32, %arg2: memref<16x12xi32, #tpu.memory_space<smem>>) -> (i32, i32) {
    %c0_i32 = arith.constant 0 : i32
    %c0_i32_0 = arith.constant 0 : i32
    %c0_i32_1 = arith.constant 0 : i32
    return %c0_i32, %c0_i32_0 : i32, i32
  }
  func.func @transform_3(%arg0: i32, %arg1: i32, %arg2: memref<16x12xi32, #tpu.memory_space<smem>>) -> (i32, i32) {
    %c0_i32 = arith.constant 0 : i32
    %c0_i32_0 = arith.constant 0 : i32
    %c0_i32_1 = arith.constant 0 : i32
    return %c0_i32, %c0_i32_0 : i32, i32
  }
  func.func @transform_4(%arg0: i32, %arg1: i32, %arg2: memref<16x12xi32, #tpu.memory_space<smem>>) -> (i32, i32) {
    %c0_i32 = arith.constant 0 : i32
    %c0_i32_0 = arith.constant 0 : i32
    %c0_i32_1 = arith.constant 0 : i32
    return %c0_i32, %c0_i32_0 : i32, i32
  }
  func.func @transform_5(%arg0: i32, %arg1: i32, %arg2: memref<16x12xi32, #tpu.memory_space<smem>>) -> (i32, i32) {
    %c0_i32 = arith.constant 0 : i32
    %c0_i32_0 = arith.constant 0 : i32
    return %c0_i32, %arg1 : i32, i32
  }
  func.func @transform_6(%arg0: i32, %arg1: i32, %arg2: memref<16x12xi32, #tpu.memory_space<smem>>) -> (i32, i32) {
    %c0_i32 = arith.constant 0 : i32
    %c0_i32_0 = arith.constant 0 : i32
    return %c0_i32, %arg1 : i32, i32
  }
  func.func @transform_7(%arg0: i32, %arg1: i32, %arg2: memref<16x12xi32, #tpu.memory_space<smem>>) -> (i32, i32) {
    %c0_i32 = arith.constant 0 : i32
    return %arg0, %arg1 : i32, i32
  }
}

</mosaic_0001>

<llo_original>
// kernel: tpu_custom_call.1
$region0: #{tpu_custom_call.1}
  #allocation0 [shape = 'u32[]', space=smem, size = 0x4, offset = 0x4, fixed_abs, tag = 'smem constant byte address 0x4 - core index']
  #allocation1 [shape = 'u32[144,128]{1,0:T(1,128)}', space=vmem, size = 0x12000, scoped, tag = 'internal scratch']
  #allocation2 [shape = 'f32[8,128]{1,0:T(8,128)}', space=vmem, size = 0x1000, scoped, tag = 'scratch operand']
  #allocation3 [shape = 's32[1]{0}', space=sflag, size = 0x4, scoped, tag = 'scoped memory for tpu_custom_call.1']
  #allocation4 [shape = 'u8[8192]{0}', space=smem, size = 0x2000, scoped, tag = 'prefetched SMEM operand 0']
  %s0 = inlined_call_operand.hbm [shape: s32[16,12], index: 0, kind: input, shape index: {}]
  %s1 = inlined_call_operand.hbm [shape: f32[256,128], index: 1, kind: input, shape index: {}]
  %s2 = inlined_call_operand.hbm [shape: bf16[128,256], index: 2, kind: input, shape index: {}]
  %s3 = inlined_call_operand.vmem [shape: f32[1,256], index: 3, kind: input, shape index: {}]
  %s4 = inlined_call_operand.hbm [shape: bf16[256,128], index: 4, kind: input, shape index: {}]
  %s5 = inlined_call_operand.vmem [shape: f32[1,128], index: 5, kind: input, shape index: {}]
  %s6 = inlined_call_operand.hbm [shape: bf16[128,256], index: 6, kind: input, shape index: {}]
  %s7 = inlined_call_operand.vmem [shape: f32[1,256], index: 7, kind: input, shape index: {}]
  %s8 = inlined_call_operand.hbm [shape: f32[16,256], index: 8, kind: output, shape index: {}]
  %s9 = sld [smem:[#allocation0]]
  $region137: #{tpu_custom_call.1} parent=0
    _
  %s11 = ssub.s32 1, %s9
  %s12 = scalar_select 0, %s11, %s9
  %14 = dma.hbm_to_smem %s0, 256, [#allocation4], [#allocation3]
  %15 = dma.done [#allocation3], 256
  %16 = sfence
  $region1: #{tpu_custom_call.1} parent=0
    #allocation5 [shape = 'u8[131072]{0}', space=vmem, size = 0x20000, scoped, tag = 'input window, operand 1, single buffered']
    #allocation6 [shape = 's32[2]{0}', space=sflag, size = 0x8, scoped, tag = 'scoped memory for tpu_custom_call.1']
    #allocation7 [shape = 's32[2]{0}', space=sflag, size = 0x8, scoped, tag = 'scoped memory for tpu_custom_call.1']
    #allocation8 [shape = 'u8[65536]{0}', space=vmem, size = 0x10000, scoped, tag = 'input window, operand 2, single buffered']
    #allocation9 [shape = 's32[1]{0}', space=sflag, size = 0x4, scoped, tag = 'scoped memory for tpu_custom_call.1']
    #allocation10 [shape = 'u8[65536]{0}', space=vmem, size = 0x10000, scoped, tag = 'input window, operand 4, single buffered']
    #allocation11 [shape = 'u8[65536]{0}', space=vmem, size = 0x10000, scoped, tag = 'input window, operand 6']
    #allocation12 [shape = 's32[2]{0}', space=sflag, size = 0x8, scoped, tag = 'scoped memory for tpu_custom_call.1']
    #allocation13 [shape = 'u8[8192]{0}', space=vmem, size = 0x2000, scoped, tag = 'output window, operand 0']
    %17 = vsyncpa [#allocation6], 0
    %18 = vsyncpa [#allocation9], 0
    %19 = vsyncpa [#allocation12], 0
    %s20 = scalar_lea.sflag [#allocation12], 1
    %21 = vsyncpa %s20, 0
    %22 = vsyncpa [#allocation7], 0
    %s23 = scalar_lea.sflag [#allocation7], 1
    %24 = vsyncpa %s23, 0
    loop: start=0, step=1, limit=6
    $region2: #{tpu_custom_call.1} parent=1 // loop_pre_header
      _
    $region3: #{tpu_custom_call.1} parent=1 // loop_header
      %s26 = sphi 0, %s30
      %p27 = scmp.ge.s32.totalorder %s26, 6
      %s33 = sphi 0, %s45
      %s34 = sphi 0, %s41
      %s35 = sphi 0, %s33
      %s36 = sphi 0, %s34
      %s37 = sphi 0, %s35
      %s38 = sphi 0, %s36
      %s46 = sphi 0, %s46
      %s48 = sphi 0, %s46
      %s49 = sphi 0, %s48
      %s63 = sphi 0, %s49
      %s67 = sphi 0, %s67
      %s69 = sphi 0, %s67
      %s70 = sphi 0, %s69
      %s84 = sphi 0, %s70
      %s88 = sphi 0, %s88
      %s90 = sphi 0, %s88
      %s91 = sphi 0, %s90
      %s105 = sphi 0, %s91
      %s109 = sphi 0, %s109
      %s111 = sphi 0, %s109
      %s112 = sphi 0, %s111
      %s126 = sphi 0, %s112
      %s130 = sphi 0, %s130
      %s132 = sphi 0, %s130
      %s133 = sphi 0, %s132
      %s147 = sphi 0, %s133
      %s153 = sphi 0, %s155
      %s156 = sphi 0, %s153
      %s157 = sphi 0, %s156
      %s173 = sphi 0, %s157
      %s179 = sphi 0, %s181
      %s182 = sphi 0, %s179
      %s183 = sphi 0, %s182
      %s199 = sphi 0, %s183
      %s207 = sphi 0, %s209
      %s210 = sphi 0, %s207
      %s211 = sphi 0, %s210
      %s227 = sphi 0, %s211
    $region4: #{tpu_custom_call.1} parent=1 // loop_header_branch
      %29 = sbr.rel (%p27) target = $region8
    $region5: #{tpu_custom_call.1} parent=1 // loop_body
      %s31 = ssub.s32 %s26, 1
      %s32 = ssub.s32 %s26, 2
      %s39 = sadd.s32 1, %s34
      %p40 = scmp.ge.s32.totalorder %s39, 2
      %s41 = scalar_select %p40, 0, %s39
      %s42 = sadd.s32 1, %s33
      %s43 = scalar_select %p40, %s42, %s33
      %p44 = scmp.ge.s32.totalorder %s43, 2
      %s45 = scalar_select %p44, 0, %s43
      %s47 = sadd.s32 %s46, 1
      %p50 = scmp.eq.s32.totalorder %s26, 3
      %p51 = scmp.ne.s32.totalorder %s46, %s48
      %p52 = scmp.eq.s32.totalorder %s26, 0
      %p53 = por %p51, %p52
      %p54 = scmp.ne.s32.totalorder %s46, %s48
      %p55 = scmp.eq.s32.totalorder %s31, 3
      %p56 = por %p54, %p55
      %p57 = scmp.ne.s32.totalorder %s48, %s49
      %p58 = scmp.eq.s32.totalorder %s31, 0
      %p59 = por %p57, %p58
      %p60 = scmp.ne.s32.totalorder %s48, %s49
      %p61 = scmp.eq.s32.totalorder %s32, 3
      %p62 = por %p60, %p61
      %p64 = scmp.ne.s32.totalorder %s49, %s63
      %p65 = scmp.eq.s32.totalorder %s32, 0
      %p66 = por %p64, %p65
      %s68 = sadd.s32 %s67, 1
      %p71 = scmp.eq.s32.totalorder %s26, 3
      %p72 = scmp.ne.s32.totalorder %s67, %s69
      %p73 = scmp.eq.s32.totalorder %s26, 0
      %p74 = por %p72, %p73
      %p75 = scmp.ne.s32.totalorder %s67, %s69
      %p76 = scmp.eq.s32.totalorder %s31, 3
      %p77 = por %p75, %p76
      %p78 = scmp.ne.s32.totalorder %s69, %s70
      %p79 = scmp.eq.s32.totalorder %s31, 0
      %p80 = por %p78, %p79
      %p81 = scmp.ne.s32.totalorder %s69, %s70
      %p82 = scmp.eq.s32.totalorder %s32, 3
      %p83 = por %p81, %p82
      %p85 = scmp.ne.s32.totalorder %s70, %s84
      %p86 = scmp.eq.s32.totalorder %s32, 0
      %p87 = por %p85, %p86
      %s89 = sadd.s32 %s88, 1
      %p92 = scmp.eq.s32.totalorder %s26, 3
      %p93 = scmp.ne.s32.totalorder %s88, %s90
      %p94 = scmp.eq.s32.totalorder %s26, 0
      %p95 = por %p93, %p94
      %p96 = scmp.ne.s32.totalorder %s88, %s90
      %p97 = scmp.eq.s32.totalorder %s31, 3
      %p98 = por %p96, %p97
      %p99 = scmp.ne.s32.totalorder %s90, %s91
      %p100 = scmp.eq.s32.totalorder %s31, 0
      %p101 = por %p99, %p100
      %p102 = scmp.ne.s32.totalorder %s90, %s91
      %p103 = scmp.eq.s32.totalorder %s32, 3
      %p104 = por %p102, %p103
      %p106 = scmp.ne.s32.totalorder %s91, %s105
      %p107 = scmp.eq.s32.totalorder %s32, 0
      %p108 = por %p106, %p107
      %s110 = sadd.s32 %s109, 1
      %p113 = scmp.eq.s32.totalorder %s26, 3
      %p114 = scmp.ne.s32.totalorder %s109, %s111
      %p115 = scmp.eq.s32.totalorder %s26, 0
      %p116 = por %p114, %p115
      %p117 = scmp.ne.s32.totalorder %s109, %s111
      %p118 = scmp.eq.s32.totalorder %s31, 3
      %p119 = por %p117, %p118
      %p120 = scmp.ne.s32.totalorder %s111, %s112
      %p121 = scmp.eq.s32.totalorder %s31, 0
      %p122 = por %p120, %p121
      %p123 = scmp.ne.s32.totalorder %s111, %s112
      %p124 = scmp.eq.s32.totalorder %s32, 3
      %p125 = por %p123, %p124
      %p127 = scmp.ne.s32.totalorder %s112, %s126
      %p128 = scmp.eq.s32.totalorder %s32, 0
      %p129 = por %p127, %p128
      %s131 = sadd.s32 %s130, 1
      %p134 = scmp.eq.s32.totalorder %s26, 3
      %p135 = scmp.ne.s32.totalorder %s130, %s132
      %p136 = scmp.eq.s32.totalorder %s26, 0
      %p137 = por %p135, %p136
      %p138 = scmp.ne.s32.totalorder %s130, %s132
      %p139 = scmp.eq.s32.totalorder %s31, 3
      %p140 = por %p138, %p139
      %p141 = scmp.ne.s32.totalorder %s132, %s133
      %p142 = scmp.eq.s32.totalorder %s31, 0
      %p143 = por %p141, %p142
      %p144 = scmp.ne.s32.totalorder %s132, %s133
      %p145 = scmp.eq.s32.totalorder %s32, 3
      %p146 = por %p144, %p145
      %p148 = scmp.ne.s32.totalorder %s133, %s147
      %p149 = scmp.eq.s32.totalorder %s32, 0
      %p150 = por %p148, %p149
      %s151 = ssub.s32 %s34, %s41
      %p152 = scmp.eq.s32.totalorder %s151, 0
      %s154 = sadd.s32 %s153, 1
      %s155 = scalar_select %p152, %s153, %s154
      %p158 = pneg %p152
      %p159 = scmp.eq.s32.totalorder %s26, 3
      %p160 = por %p158, %p159
      %p161 = scmp.ne.s32.totalorder %s153, %s156
      %p162 = scmp.eq.s32.totalorder %s26, 0
      %p163 = por %p161, %p162
      %p164 = scmp.ne.s32.totalorder %s153, %s156
      %p165 = scmp.eq.s32.totalorder %s31, 3
      %p166 = por %p164, %p165
      %p167 = scmp.ne.s32.totalorder %s156, %s157
      %p168 = scmp.eq.s32.totalorder %s31, 0
      %p169 = por %p167, %p168
      %p170 = scmp.ne.s32.totalorder %s156, %s157
      %p171 = scmp.eq.s32.totalorder %s32, 3
      %p172 = por %p170, %p171
      %p174 = scmp.ne.s32.totalorder %s157, %s173
      %p175 = scmp.eq.s32.totalorder %s32, 0
      %p176 = por %p174, %p175
      %s177 = ssub.s32 %s34, %s41
      %p178 = scmp.eq.s32.totalorder %s177, 0
      %s180 = sadd.s32 %s179, 1
      %s181 = scalar_select %p178, %s179, %s180
      %p184 = pneg %p178
      %p185 = scmp.eq.s32.totalorder %s26, 3
      %p186 = por %p184, %p185
      %p187 = scmp.ne.s32.totalorder %s179, %s182
      %p188 = scmp.eq.s32.totalorder %s26, 0
      %p189 = por %p187, %p188
      %p190 = scmp.ne.s32.totalorder %s179, %s182
      %p191 = scmp.eq.s32.totalorder %s31, 3
      %p192 = por %p190, %p191
      %p193 = scmp.ne.s32.totalorder %s182, %s183
      %p194 = scmp.eq.s32.totalorder %s31, 0
      %p195 = por %p193, %p194
      %p196 = scmp.ne.s32.totalorder %s182, %s183
      %p197 = scmp.eq.s32.totalorder %s32, 3
      %p198 = por %p196, %p197
      %p200 = scmp.ne.s32.totalorder %s183, %s199
      %p201 = scmp.eq.s32.totalorder %s32, 0
      %p202 = por %p200, %p201
      %s203 = ssub.s32 %s33, %s45
      %s204 = ssub.s32 %s34, %s41
      %s205 = sor.u32 %s203, %s204
      %p206 = scmp.eq.s32.totalorder %s205, 0
      %s208 = sadd.s32 %s207, 1
      %s209 = scalar_select %p206, %s207, %s208
      %p212 = pneg %p206
      %p213 = scmp.eq.s32.totalorder %s26, 3
      %p214 = por %p212, %p213
      %p215 = scmp.ne.s32.totalorder %s207, %s210
      %p216 = scmp.eq.s32.totalorder %s26, 0
      %p217 = por %p215, %p216
      %p218 = scmp.ne.s32.totalorder %s207, %s210
      %p219 = scmp.eq.s32.totalorder %s31, 3
      %p220 = por %p218, %p219
      %p221 = scmp.ne.s32.totalorder %s210, %s211
      %p222 = scmp.eq.s32.totalorder %s31, 0
      %p223 = por %p221, %p222
      %p224 = scmp.ne.s32.totalorder %s210, %s211
      %p225 = scmp.eq.s32.totalorder %s32, 3
      %p226 = por %p224, %p225
      %p228 = scmp.ne.s32.totalorder %s211, %s227
      %p229 = scmp.eq.s32.totalorder %s32, 0
      %p230 = por %p228, %p229
      %p231 = scmp.le.s32.totalorder 1, %s26
      %p232 = scmp.lt.s32.totalorder %s26, 5
      %p233 = pnand %p231, %p232
      %p234 = pneg %p233
      // Predicated region
      $region9: #{tpu_custom_call.1} parent=5 // pred_check
        _
      $region10: #{tpu_custom_call.1} parent=5 // pred_check_branch
        %236 = sbr.rel (%p233) target = $region12
      $region11: #{tpu_custom_call.1} parent=5 // pred_region
        %s237 = ssub.s32 %s26, 1
        // Predicated region
        $region13: #{tpu_custom_call.1} parent=11 // pred_check
          %p238 = pneg %p59
        $region14: #{tpu_custom_call.1} parent=11 // pred_check_branch
          %240 = sbr.rel (%p238) target = $region16
        $region15: #{tpu_custom_call.1} parent=11 // pred_region
          %s242 = ssub.s32 4096, 4096
          %243 = vsyncadd [#allocation6], %s242
          %s244 = sshll.u32 [#allocation5], 4
          %s245 = int_to_ptr.vmem [resolvable:$true] %s244
          %250 = dma.hbm_to_vmem [thread:$0]  %s1, 4096, %s245, [#allocation6], 128, 128, 8
        $region16: #{tpu_custom_call.1} parent=11 // pred_fallthru
          _
        // Predicated region
        $region17: #{tpu_custom_call.1} parent=11 // pred_check
          %p251 = pneg %p80
        $region18: #{tpu_custom_call.1} parent=11 // pred_check_branch
          %253 = sbr.rel (%p251) target = $region20
        $region19: #{tpu_custom_call.1} parent=11 // pred_region
          %s255 = ssub.s32 2048, 2048
          %256 = vsyncadd [#allocation9], %s255
          %s257 = sshll.u32 [#allocation8], 4
          %s258 = int_to_ptr.vmem [resolvable:$true] %s257
          %263 = dma.hbm_to_vmem [thread:$0]  %s2, 2048, %s258, [#allocation9], 128, 128, 8
        $region20: #{tpu_custom_call.1} parent=11 // pred_fallthru
          _
        // Predicated region
        $region21: #{tpu_custom_call.1} parent=11 // pred_check
          %p264 = pneg %p101
        $region22: #{tpu_custom_call.1} parent=11 // pred_check_branch
          %266 = sbr.rel (%p264) target = $region24
        $region23: #{tpu_custom_call.1} parent=11 // pred_region
          _
        $region24: #{tpu_custom_call.1} parent=11 // pred_fallthru
          _
        // Predicated region
        $region25: #{tpu_custom_call.1} parent=11 // pred_check
          %p267 = pneg %p122
        $region26: #{tpu_custom_call.1} parent=11 // pred_check_branch
          %269 = sbr.rel (%p267) target = $region28
        $region27: #{tpu_custom_call.1} parent=11 // pred_region
          %s271 = ssub.s32 2048, 2048
          %272 = vsyncadd [#allocation9], %s271
          %s273 = sshll.u32 [#allocation10], 4
          %s274 = int_to_ptr.vmem [resolvable:$true] %s273
          %279 = dma.hbm_to_vmem [thread:$0]  %s4, 2048, %s274, [#allocation9], 64, 64, 4
        $region28: #{tpu_custom_call.1} parent=11 // pred_fallthru
          _
        // Predicated region
        $region29: #{tpu_custom_call.1} parent=11 // pred_check
          %p280 = pneg %p143
        $region30: #{tpu_custom_call.1} parent=11 // pred_check_branch
          %282 = sbr.rel (%p280) target = $region32
        $region31: #{tpu_custom_call.1} parent=11 // pred_region
          _
        $region32: #{tpu_custom_call.1} parent=11 // pred_fallthru
          _
      $region12: #{tpu_custom_call.1} parent=5 // pred_fallthru
        _
      %p283 = scmp.lt.s32.totalorder %s26, 4
      // Predicated region
      $region33: #{tpu_custom_call.1} parent=5 // pred_check
        %p284 = pneg %p283
      $region34: #{tpu_custom_call.1} parent=5 // pred_check_branch
        %286 = sbr.rel (%p284) target = $region36
      $region35: #{tpu_custom_call.1} parent=5 // pred_region
        // Predicated region
        $region37: #{tpu_custom_call.1} parent=35 // pred_check
          %p287 = pneg %p163
        $region38: #{tpu_custom_call.1} parent=35 // pred_check_branch
          %289 = sbr.rel (%p287) target = $region40
        $region39: #{tpu_custom_call.1} parent=35 // pred_region
          %s290 = sand.u32 %s153, 1
          %s291 = scalar_lea.sflag [#allocation12], %s290
          %s292 = sand.u32 %s153, 1
          %s293 = smul.addr %s292, 64
          %s294 = scalar_lea.vmem [#allocation11], %s293
          %s296 = ssub.s32 1024, 1024
          %297 = vsyncadd %s291, %s296
          %s298 = smul.addr %s34, 64
          %s299 = scalar_lea.hbm %s6, %s298
          %s300 = sshll.u32 %s294, 4
          %s301 = int_to_ptr.vmem [resolvable:$true] %s300
          %306 = dma.hbm_to_vmem [thread:$0]  %s299, 1024, %s301, %s291, 128, 64, 4
        $region40: #{tpu_custom_call.1} parent=35 // pred_fallthru
          _
        // Predicated region
        $region41: #{tpu_custom_call.1} parent=35 // pred_check
          %p307 = pneg %p189
        $region42: #{tpu_custom_call.1} parent=35 // pred_check_branch
          %309 = sbr.rel (%p307) target = $region44
        $region43: #{tpu_custom_call.1} parent=35 // pred_region
          %p310 = scmp.lt.s32.totalorder %s34, 1
          %s311 = scalar_select %p310, %s34, 1
          %s312 = scalar_lea.vmem %s7, %s311
        $region44: #{tpu_custom_call.1} parent=35 // pred_fallthru
          _
      $region36: #{tpu_custom_call.1} parent=5 // pred_fallthru
        _
      %p313 = scmp.le.s32.totalorder 1, %s26
      %p314 = scmp.lt.s32.totalorder %s26, 5
      %p315 = pnand %p313, %p314
      %p316 = pneg %p315
      // Predicated region
      $region45: #{tpu_custom_call.1} parent=5 // pred_check
        _
      $region46: #{tpu_custom_call.1} parent=5 // pred_check_branch
        %318 = sbr.rel (%p315) target = $region48
      $region47: #{tpu_custom_call.1} parent=5 // pred_region
        %s319 = ssub.s32 %s26, 1
        // Predicated region
        $region49: #{tpu_custom_call.1} parent=47 // pred_check
          %p320 = pneg %p59
        $region50: #{tpu_custom_call.1} parent=47 // pred_check_branch
          %322 = sbr.rel (%p320) target = $region52
        $region51: #{tpu_custom_call.1} parent=47 // pred_region
          %323 = dma.done [#allocation6], 4096
        $region52: #{tpu_custom_call.1} parent=47 // pred_fallthru
          _
        // Predicated region
        $region53: #{tpu_custom_call.1} parent=47 // pred_check
          %p324 = pneg %p80
        $region54: #{tpu_custom_call.1} parent=47 // pred_check_branch
          %326 = sbr.rel (%p324) target = $region56
        $region55: #{tpu_custom_call.1} parent=47 // pred_region
          %327 = dma.done [#allocation9], 2048
        $region56: #{tpu_custom_call.1} parent=47 // pred_fallthru
          _
        // Predicated region
        $region57: #{tpu_custom_call.1} parent=47 // pred_check
          %p328 = pneg %p122
        $region58: #{tpu_custom_call.1} parent=47 // pred_check_branch
          %330 = sbr.rel (%p328) target = $region60
        $region59: #{tpu_custom_call.1} parent=47 // pred_region
          %331 = dma.done [#allocation9], 2048
        $region60: #{tpu_custom_call.1} parent=47 // pred_fallthru
          _
        %s332 = sand.u32 %s156, 1
        %s333 = scalar_lea.sflag [#allocation12], %s332
        %s334 = sand.u32 %s156, 1
        %s335 = smul.addr %s334, 64
        %s336 = scalar_lea.vmem [#allocation11], %s335
        // Predicated region
        $region61: #{tpu_custom_call.1} parent=47 // pred_check
          %p337 = pneg %p169
        $region62: #{tpu_custom_call.1} parent=47 // pred_check_branch
          %339 = sbr.rel (%p337) target = $region64
        $region63: #{tpu_custom_call.1} parent=47 // pred_region
          %340 = dma.done %s333, 1024
        $region64: #{tpu_custom_call.1} parent=47 // pred_fallthru
          _
        %p341 = pneg %p59
        %p342 = pneg %p56
        %p343 = pneg %p80
        %p344 = pneg %p77
        %p345 = pneg %p101
        %p346 = pneg %p98
        %p347 = pneg %p122
        %p348 = pneg %p119
        %p349 = pneg %p143
        %p350 = pneg %p140
        %s351 = sand.u32 %s156, 1
        %s352 = scalar_lea.sflag [#allocation12], %s351
        %s353 = sand.u32 %s156, 1
        %s354 = smul.addr %s353, 64
        %s355 = scalar_lea.vmem [#allocation11], %s354
        %p356 = pneg %p169
        %p357 = pneg %p166
        %p358 = scmp.lt.s32.totalorder %s36, 1
        %s359 = scalar_select %p358, %s36, 1
        %s360 = scalar_lea.vmem %s7, %s359
        %p361 = pneg %p195
        %p362 = pneg %p192
        %p363 = pneg %p223
        %p364 = pneg %p220
        %s365 = sand.u32 %s210, 1
        %s366 = scalar_lea.sflag [#allocation7], %s365
        %s367 = sand.u32 %s210, 1
        %s368 = smul.addr %s367, 8
        %s369 = scalar_lea.vmem [#allocation13], %s368
        %p370 = scmp.lt.s32.totalorder %s36, 1
        %s371 = scalar_select %p370, %s36, 1
        %s372 = scalar_lea.vmem %s7, %s371
        %p374 = scmp.eq.s32.totalorder %s36, 0
        // Predicated region
        $region65: #{tpu_custom_call.1} parent=47 // pred_check
          %p375 = pneg %p374
        $region66: #{tpu_custom_call.1} parent=47 // pred_check_branch
          %377 = sbr.rel (%p375) target = $region68
        $region67: #{tpu_custom_call.1} parent=47 // pred_region
          loop: start=0, step=1, limit=12
          $region69: #{tpu_custom_call.1} parent=67 // loop_pre_header
            _
          $region70: #{tpu_custom_call.1} parent=67 // loop_header
            %s379 = sphi 0, %s383
            %p380 = scmp.ge.s32.totalorder %s379, 12
            %v384 = vphi 0.0, %v396
          $region71: #{tpu_custom_call.1} parent=67 // loop_header_branch
            %382 = sbr.rel (%p380) target = $region75
          $region72: #{tpu_custom_call.1} parent=67 // loop_body
            %s385 = smul.u32 %s35, 8
            %s386 = sshra.s32 %s379, 7
            %s387 = sand.u32 %s379, 127
            %s388 = sadd.s32 %s386, %s385
            %s389 = smul.u32 %s388, 128
            %s390 = sshra.s32 %s379, 7
            %s391 = sand.u32 %s379, 127
            %s392 = sadd.s32 %s389, %s391
            %s393 = sld [smem:[#allocation4 + %s392]]
            %s394 = scalar_lea.vmem [#allocation5], %s393
            %v395 = vld [vmem:[%s394] sm:$0x1]
            %v396 = vadd.f32 %v384, %v395
          $region73: #{tpu_custom_call.1} parent=67 // loop_footer
            %s383 = sadd.s32 1, %s379
          $region74: #{tpu_custom_call.1} parent=67 // loop_footer_branch
            %378 = sbr.rel target = $region70
          $region75: #{tpu_custom_call.1} parent=67 // loop_exit
            _
          loop: start=0, step=1, limit=12
          $region76: #{tpu_custom_call.1} parent=67 // loop_pre_header
            _
          $region77: #{tpu_custom_call.1} parent=67 // loop_header
            %s398 = sphi 0, %s402
            %p399 = scmp.ge.s32.totalorder %s398, 12
            %v403 = vphi 0.0, %v416
          $region78: #{tpu_custom_call.1} parent=67 // loop_header_branch
            %401 = sbr.rel (%p399) target = $region82
          $region79: #{tpu_custom_call.1} parent=67 // loop_body
            %s404 = smul.u32 %s35, 8
            %s405 = sadd.s32 %s404, 1
            %s406 = sshra.s32 %s398, 7
            %s407 = sand.u32 %s398, 127
            %s408 = sadd.s32 %s406, %s405
            %s409 = smul.u32 %s408, 128
            %s410 = sshra.s32 %s398, 7
            %s411 = sand.u32 %s398, 127
            %s412 = sadd.s32 %s409, %s411
            %s413 = sld [smem:[#allocation4 + %s412]]
            %s414 = scalar_lea.vmem [#allocation5], %s413
            %v415 = vld [vmem:[%s414] sm:$0x1]
            %v416 = vadd.f32 %v403, %v415
          $region80: #{tpu_custom_call.1} parent=67 // loop_footer
            %s402 = sadd.s32 1, %s398
          $region81: #{tpu_custom_call.1} parent=67 // loop_footer_branch
            %397 = sbr.rel target = $region77
          $region82: #{tpu_custom_call.1} parent=67 // loop_exit
            _
          loop: start=0, step=1, limit=12
          $region83: #{tpu_custom_call.1} parent=67 // loop_pre_header
            _
          $region84: #{tpu_custom_call.1} parent=67 // loop_header
            %s418 = sphi 0, %s422
            %p419 = scmp.ge.s32.totalorder %s418, 12
            %v423 = vphi 0.0, %v436
          $region85: #{tpu_custom_call.1} parent=67 // loop_header_branch
            %421 = sbr.rel (%p419) target = $region89
          $region86: #{tpu_custom_call.1} parent=67 // loop_body
            %s424 = smul.u32 %s35, 8
            %s425 = sadd.s32 %s424, 2
            %s426 = sshra.s32 %s418, 7
            %s427 = sand.u32 %s418, 127
            %s428 = sadd.s32 %s426, %s425
            %s429 = smul.u32 %s428, 128
            %s430 = sshra.s32 %s418, 7
            %s431 = sand.u32 %s418, 127
            %s432 = sadd.s32 %s429, %s431
            %s433 = sld [smem:[#allocation4 + %s432]]
            %s434 = scalar_lea.vmem [#allocation5], %s433
            %v435 = vld [vmem:[%s434] sm:$0x1]
            %v436 = vadd.f32 %v423, %v435
          $region87: #{tpu_custom_call.1} parent=67 // loop_footer
            %s422 = sadd.s32 1, %s418
          $region88: #{tpu_custom_call.1} parent=67 // loop_footer_branch
            %417 = sbr.rel target = $region84
          $region89: #{tpu_custom_call.1} parent=67 // loop_exit
            _
          loop: start=0, step=1, limit=12
          $region90: #{tpu_custom_call.1} parent=67 // loop_pre_header
            _
          $region91: #{tpu_custom_call.1} parent=67 // loop_header
            %s438 = sphi 0, %s442
            %p439 = scmp.ge.s32.totalorder %s438, 12
            %v443 = vphi 0.0, %v456
          $region92: #{tpu_custom_call.1} parent=67 // loop_header_branch
            %441 = sbr.rel (%p439) target = $region96
          $region93: #{tpu_custom_call.1} parent=67 // loop_body
            %s444 = smul.u32 %s35, 8
            %s445 = sadd.s32 %s444, 3
            %s446 = sshra.s32 %s438, 7
            %s447 = sand.u32 %s438, 127
            %s448 = sadd.s32 %s446, %s445
            %s449 = smul.u32 %s448, 128
            %s450 = sshra.s32 %s438, 7
            %s451 = sand.u32 %s438, 127
            %s452 = sadd.s32 %s449, %s451
            %s453 = sld [smem:[#allocation4 + %s452]]
            %s454 = scalar_lea.vmem [#allocation5], %s453
            %v455 = vld [vmem:[%s454] sm:$0x1]
            %v456 = vadd.f32 %v443, %v455
          $region94: #{tpu_custom_call.1} parent=67 // loop_footer
            %s442 = sadd.s32 1, %s438
          $region95: #{tpu_custom_call.1} parent=67 // loop_footer_branch
            %437 = sbr.rel target = $region91
          $region96: #{tpu_custom_call.1} parent=67 // loop_exit
            _
          loop: start=0, step=1, limit=12
          $region97: #{tpu_custom_call.1} parent=67 // loop_pre_header
            _
          $region98: #{tpu_custom_call.1} parent=67 // loop_header
            %s458 = sphi 0, %s462
            %p459 = scmp.ge.s32.totalorder %s458, 12
            %v463 = vphi 0.0, %v476
          $region99: #{tpu_custom_call.1} parent=67 // loop_header_branch
            %461 = sbr.rel (%p459) target = $region103
          $region100: #{tpu_custom_call.1} parent=67 // loop_body
            %s464 = smul.u32 %s35, 8
            %s465 = sadd.s32 %s464, 4
            %s466 = sshra.s32 %s458, 7
            %s467 = sand.u32 %s458, 127
            %s468 = sadd.s32 %s466, %s465
            %s469 = smul.u32 %s468, 128
            %s470 = sshra.s32 %s458, 7
            %s471 = sand.u32 %s458, 127
            %s472 = sadd.s32 %s469, %s471
            %s473 = sld [smem:[#allocation4 + %s472]]
            %s474 = scalar_lea.vmem [#allocation5], %s473
            %v475 = vld [vmem:[%s474] sm:$0x1]
            %v476 = vadd.f32 %v463, %v475
          $region101: #{tpu_custom_call.1} parent=67 // loop_footer
            %s462 = sadd.s32 1, %s458
          $region102: #{tpu_custom_call.1} parent=67 // loop_footer_branch
            %457 = sbr.rel target = $region98
          $region103: #{tpu_custom_call.1} parent=67 // loop_exit
            _
          loop: start=0, step=1, limit=12
          $region104: #{tpu_custom_call.1} parent=67 // loop_pre_header
            _
          $region105: #{tpu_custom_call.1} parent=67 // loop_header
            %s478 = sphi 0, %s482
            %p479 = scmp.ge.s32.totalorder %s478, 12
            %v483 = vphi 0.0, %v496
          $region106: #{tpu_custom_call.1} parent=67 // loop_header_branch
            %481 = sbr.rel (%p479) target = $region110
          $region107: #{tpu_custom_call.1} parent=67 // loop_body
            %s484 = smul.u32 %s35, 8
            %s485 = sadd.s32 %s484, 5
            %s486 = sshra.s32 %s478, 7
            %s487 = sand.u32 %s478, 127
            %s488 = sadd.s32 %s486, %s485
            %s489 = smul.u32 %s488, 128
            %s490 = sshra.s32 %s478, 7
            %s491 = sand.u32 %s478, 127
            %s492 = sadd.s32 %s489, %s491
            %s493 = sld [smem:[#allocation4 + %s492]]
            %s494 = scalar_lea.vmem [#allocation5], %s493
            %v495 = vld [vmem:[%s494] sm:$0x1]
            %v496 = vadd.f32 %v483, %v495
          $region108: #{tpu_custom_call.1} parent=67 // loop_footer
            %s482 = sadd.s32 1, %s478
          $region109: #{tpu_custom_call.1} parent=67 // loop_footer_branch
            %477 = sbr.rel target = $region105
          $region110: #{tpu_custom_call.1} parent=67 // loop_exit
            _
          loop: start=0, step=1, limit=12
          $region111: #{tpu_custom_call.1} parent=67 // loop_pre_header
            _
          $region112: #{tpu_custom_call.1} parent=67 // loop_header
            %s498 = sphi 0, %s502
            %p499 = scmp.ge.s32.totalorder %s498, 12
            %v503 = vphi 0.0, %v516
          $region113: #{tpu_custom_call.1} parent=67 // loop_header_branch
            %501 = sbr.rel (%p499) target = $region117
          $region114: #{tpu_custom_call.1} parent=67 // loop_body
            %s504 = smul.u32 %s35, 8
            %s505 = sadd.s32 %s504, 6
            %s506 = sshra.s32 %s498, 7
            %s507 = sand.u32 %s498, 127
            %s508 = sadd.s32 %s506, %s505
            %s509 = smul.u32 %s508, 128
            %s510 = sshra.s32 %s498, 7
            %s511 = sand.u32 %s498, 127
            %s512 = sadd.s32 %s509, %s511
            %s513 = sld [smem:[#allocation4 + %s512]]
            %s514 = scalar_lea.vmem [#allocation5], %s513
            %v515 = vld [vmem:[%s514] sm:$0x1]
            %v516 = vadd.f32 %v503, %v515
          $region115: #{tpu_custom_call.1} parent=67 // loop_footer
            %s502 = sadd.s32 1, %s498
          $region116: #{tpu_custom_call.1} parent=67 // loop_footer_branch
            %497 = sbr.rel target = $region112
          $region117: #{tpu_custom_call.1} parent=67 // loop_exit
            _
          loop: start=0, step=1, limit=12
          $region118: #{tpu_custom_call.1} parent=67 // loop_pre_header
            _
          $region119: #{tpu_custom_call.1} parent=67 // loop_header
            %s518 = sphi 0, %s522
            %p519 = scmp.ge.s32.totalorder %s518, 12
            %v523 = vphi 0.0, %v536
          $region120: #{tpu_custom_call.1} parent=67 // loop_header_branch
            %521 = sbr.rel (%p519) target = $region124
          $region121: #{tpu_custom_call.1} parent=67 // loop_body
            %s524 = smul.u32 %s35, 8
            %s525 = sadd.s32 %s524, 7
            %s526 = sshra.s32 %s518, 7
            %s527 = sand.u32 %s518, 127
            %s528 = sadd.s32 %s526, %s525
            %s529 = smul.u32 %s528, 128
            %s530 = sshra.s32 %s518, 7
            %s531 = sand.u32 %s518, 127
            %s532 = sadd.s32 %s529, %s531
            %s533 = sld [smem:[#allocation4 + %s532]]
            %s534 = scalar_lea.vmem [#allocation5], %s533
            %v535 = vld [vmem:[%s534] sm:$0x1]
            %v536 = vadd.f32 %v523, %v535
          $region122: #{tpu_custom_call.1} parent=67 // loop_footer
            %s522 = sadd.s32 1, %s518
          $region123: #{tpu_custom_call.1} parent=67 // loop_footer_branch
            %517 = sbr.rel target = $region119
          $region124: #{tpu_custom_call.1} parent=67 // loop_exit
            _
          %v538 = vrot.slane %v403, 7
          %v541 = vrot.slane %v423, 6
          %v544 = vrot.slane %v443, 5
          %v547 = vrot.slane %v463, 4
          %v550 = vrot.slane %v483, 3
          %v553 = vrot.slane %v503, 2
          %v556 = vrot.slane %v523, 1
          %vm558 = vcmask 1040384
          %v559 = vsel %vm558, %v384, %v538
          %vm560 = vcmask 1041408
          %v561 = vsel %vm560, %v559, %v541
          %vm562 = vcmask 1042432
          %v563 = vsel %vm562, %v561, %v544
          %vm564 = vcmask 1043456
          %v565 = vsel %vm564, %v563, %v547
          %vm566 = vcmask 1044480
          %v567 = vsel %vm566, %v565, %v550
          %vm568 = vcmask 1045504
          %v569 = vsel %vm568, %v567, %v553
          %vm570 = vcmask 1046528
          %v571 = vsel %vm570, %v569, %v556
          %v572 = vmul.f32 %v571, 0.083333336
          %v573 = vpack.c.bf16 %v572, %v572
          %v574 = vld [vmem:[#allocation8] sm:$0xff]
          %v575 = vld [vmem:[#allocation8 + $0x8] sm:$0xff]
          %v576 = vld [vmem:[#allocation8 + $0x10] sm:$0xff]
          %v577 = vld [vmem:[#allocation8 + $0x18] sm:$0xff]
          %v578 = vld [vmem:[#allocation8 + $0x20] sm:$0xff]
          %v579 = vld [vmem:[#allocation8 + $0x28] sm:$0xff]
          %v580 = vld [vmem:[#allocation8 + $0x30] sm:$0xff]
          %v581 = vld [vmem:[#allocation8 + $0x38] sm:$0xff]
          %v582 = vld [vmem:[#allocation8 + $0x40] sm:$0xff]
          %v583 = vld [vmem:[#allocation8 + $0x48] sm:$0xff]
          %v584 = vld [vmem:[#allocation8 + $0x50] sm:$0xff]
          %v585 = vld [vmem:[#allocation8 + $0x58] sm:$0xff]
          %v586 = vld [vmem:[#allocation8 + $0x60] sm:$0xff]
          %v587 = vld [vmem:[#allocation8 + $0x68] sm:$0xff]
          %v588 = vld [vmem:[#allocation8 + $0x70] sm:$0xff]
          %v589 = vld [vmem:[#allocation8 + $0x78] sm:$0xff]
          %v590 = vld [vmem:[%s3] sm:$0x3]
          %v592 = vlaneseq
          %v593 = vshrl.u32 %v592, 7
          %v594 = vsub.s32 0, %v593
          %v595 = vrot.slane %v590, %v594
          %v596 = vlaneseq
          %v597 = vshrl.u32 %v596, 7
          %v598 = vsub.s32 1, %v597
          %v599 = vrot.slane %v590, %v598
          %v618 = vunpack.c.l.b16 %v574
          %v619 = vunpack.c.h.b16 %v574
          %v620 = vunpack.c.l.b16 %v575
          %v621 = vunpack.c.h.b16 %v575
          %v622 = vunpack.c.l.b16 %v576
          %v623 = vunpack.c.h.b16 %v576
          %v624 = vunpack.c.l.b16 %v577
          %v625 = vunpack.c.h.b16 %v577
          %v626 = vunpack.c.l.b16 %v578
          %v627 = vunpack.c.h.b16 %v578
          %v628 = vunpack.c.l.b16 %v579
          %v629 = vunpack.c.h.b16 %v579
          %v630 = vunpack.c.l.b16 %v580
          %v631 = vunpack.c.h.b16 %v580
          %v632 = vunpack.c.l.b16 %v581
          %v633 = vunpack.c.h.b16 %v581
          %v634 = vunpack.c.l.b16 %v582
          %v635 = vunpack.c.h.b16 %v582
          %v636 = vunpack.c.l.b16 %v583
          %v637 = vunpack.c.h.b16 %v583
          %v638 = vunpack.c.l.b16 %v584
          %v639 = vunpack.c.h.b16 %v584
          %v640 = vunpack.c.l.b16 %v585
          %v641 = vunpack.c.h.b16 %v585
          %v642 = vunpack.c.l.b16 %v586
          %v643 = vunpack.c.h.b16 %v586
          %v644 = vunpack.c.l.b16 %v587
          %v645 = vunpack.c.h.b16 %v587
          %v646 = vunpack.c.l.b16 %v588
          %v647 = vunpack.c.h.b16 %v588
          %v648 = vunpack.c.l.b16 %v589
          %v649 = vunpack.c.h.b16 %v589
          %v650 = vpack.c.b16 %v620, %v618
          %v651 = vpack.c.b16 %v621, %v619
          %v652 = vpack.c.b16 %v624, %v622
          %v653 = vpack.c.b16 %v625, %v623
          %v654 = vpack.c.b16 %v628, %v626
          %v655 = vpack.c.b16 %v629, %v627
          %v656 = vpack.c.b16 %v632, %v630
          %v657 = vpack.c.b16 %v633, %v631
          %v658 = vpack.c.b16 %v636, %v634
          %v659 = vpack.c.b16 %v637, %v635
          %v660 = vpack.c.b16 %v640, %v638
          %v661 = vpack.c.b16 %v641, %v639
          %v662 = vpack.c.b16 %v644, %v642
          %v663 = vpack.c.b16 %v645, %v643
          %v664 = vpack.c.b16 %v648, %v646
          %v665 = vpack.c.b16 %v649, %v647
          %682 = vmatprep.subr.bf16.mxu0 %v665
          %683 = vmatpush1.bf16.msra.mxu0 %v664
          %684 = vmatprep.subr.bf16.mxu0 %v663
          %685 = vmatpush1.bf16.msra.mxu0 %v662
          %686 = vmatprep.subr.bf16.mxu0 %v661
          %687 = vmatpush1.bf16.msra.mxu0 %v660
          %688 = vmatprep.subr.bf16.mxu0 %v659
          %689 = vmatpush1.bf16.msra.mxu0 %v658
          %690 = vmatprep.subr.bf16.mxu0 %v657
          %691 = vmatpush1.bf16.msra.mxu0 %v656
          %692 = vmatprep.subr.bf16.mxu0 %v655
          %693 = vmatpush1.bf16.msra.mxu0 %v654
          %694 = vmatprep.subr.bf16.mxu0 %v653
          %695 = vmatpush1.bf16.msra.mxu0 %v652
          %696 = vmatprep.subr.bf16.mxu0 %v651
          %697 = vmatpush1.bf16.msra.mxu0 %v650
          %698 = vmatprep.subr.bf16.mxu0 0
          %699 = vmatpush2.bf16.msra.mxu0 0
          %700 = vmatprep.subr.bf16.mxu0 0
          %701 = vmatpush2.bf16.msra.mxu0 0
          %702 = vmatprep.subr.bf16.mxu0 0
          %703 = vmatpush2.bf16.msra.mxu0 0
          %704 = vmatprep.subr.bf16.mxu0 0
          %705 = vmatpush2.bf16.msra.mxu0 0
          %706 = vmatprep.subr.bf16.mxu0 0
          %707 = vmatpush2.bf16.msra.mxu0 0
          %708 = vmatprep.subr.bf16.mxu0 0
          %709 = vmatpush2.bf16.msra.mxu0 0
          %710 = vmatprep.subr.bf16.mxu0 0
          %711 = vmatpush2.bf16.msra.mxu0 0
          %712 = vmatprep.subr.bf16.mxu0 0
          %713 = vmatpush2.bf16.msra.mxu0 0
          %714 = vmatprep.mubr.bf16.mxu0 0
          %715 = vmatmul.mubr.bf16.gmra.mxu0 %v573
          %v716 = vpop.f32.mrf.mxu0
          %v717 = vadd.f32 %v595, %v716
          %v718 = vpop.f32.mrf.mxu0
          %v719 = vadd.f32 %v599, %v718
          %v720 = vpop.f32.mrf.mxu0
          %v721 = vpop.f32.mrf.mxu0
          %722 = vdwg.mxu0
          %v723 = vmax.f32 %v717, 0.0
          %v724 = vmax.f32 %v719, 0.0
          %v725 = vpack.c.bf16 %v723, %v723
          %v726 = vpack.c.bf16 %v724, %v724
          %v727 = vld [vmem:[#allocation10] sm:$0xf]
          %v728 = vld [vmem:[#allocation10 + $0x4] sm:$0xf]
          %v729 = vld [vmem:[#allocation10 + $0x8] sm:$0xf]
          %v730 = vld [vmem:[#allocation10 + $0xc] sm:$0xf]
          %v731 = vld [vmem:[#allocation10 + $0x10] sm:$0xf]
          %v732 = vld [vmem:[#allocation10 + $0x14] sm:$0xf]
          %v733 = vld [vmem:[#allocation10 + $0x18] sm:$0xf]
          %v734 = vld [vmem:[#allocation10 + $0x1c] sm:$0xf]
          %v735 = vld [vmem:[#allocation10 + $0x20] sm:$0xf]
          %v736 = vld [vmem:[#allocation10 + $0x24] sm:$0xf]
          %v737 = vld [vmem:[#allocation10 + $0x28] sm:$0xf]
          %v738 = vld [vmem:[#allocation10 + $0x2c] sm:$0xf]
          %v739 = vld [vmem:[#allocation10 + $0x30] sm:$0xf]
          %v740 = vld [vmem:[#allocation10 + $0x34] sm:$0xf]
          %v741 = vld [vmem:[#allocation10 + $0x38] sm:$0xf]
          %v742 = vld [vmem:[#allocation10 + $0x3c] sm:$0xf]
          %v743 = vld [vmem:[#allocation10 + $0x40] sm:$0xf]
          %v744 = vld [vmem:[#allocation10 + $0x44] sm:$0xf]
          %v745 = vld [vmem:[#allocation10 + $0x48] sm:$0xf]
          %v746 = vld [vmem:[#allocation10 + $0x4c] sm:$0xf]
          %v747 = vld [vmem:[#allocation10 + $0x50] sm:$0xf]
          %v748 = vld [vmem:[#allocation10 + $0x54] sm:$0xf]
          %v749 = vld [vmem:[#allocation10 + $0x58] sm:$0xf]
          %v750 = vld [vmem:[#allocation10 + $0x5c] sm:$0xf]
          %v751 = vld [vmem:[#allocation10 + $0x60] sm:$0xf]
          %v752 = vld [vmem:[#allocation10 + $0x64] sm:$0xf]
          %v753 = vld [vmem:[#allocation10 + $0x68] sm:$0xf]
          %v754 = vld [vmem:[#allocation10 + $0x6c] sm:$0xf]
          %v755 = vld [vmem:[#allocation10 + $0x70] sm:$0xf]
          %v756 = vld [vmem:[#allocation10 + $0x74] sm:$0xf]
          %v757 = vld [vmem:[#allocation10 + $0x78] sm:$0xf]
          %v758 = vld [vmem:[#allocation10 + $0x7c] sm:$0xf]
          %v759 = vld [vmem:[%s5] sm:$0x1]
          %v761 = vlaneseq
          %v762 = vshrl.u32 %v761, 7
          %v763 = vsub.s32 0, %v762
          %v764 = vrot.slane %v759, %v763
          %v798 = vunpack.c.l.b16 %v727
          %v799 = vunpack.c.l.b16 %v728
          %v800 = vunpack.c.l.b16 %v729
          %v801 = vunpack.c.l.b16 %v730
          %v802 = vunpack.c.l.b16 %v731
          %v803 = vunpack.c.l.b16 %v732
          %v804 = vunpack.c.l.b16 %v733
          %v805 = vunpack.c.l.b16 %v734
          %v806 = vunpack.c.l.b16 %v735
          %v807 = vunpack.c.l.b16 %v736
          %v808 = vunpack.c.l.b16 %v737
          %v809 = vunpack.c.l.b16 %v738
          %v810 = vunpack.c.l.b16 %v739
          %v811 = vunpack.c.l.b16 %v740
          %v812 = vunpack.c.l.b16 %v741
          %v813 = vunpack.c.l.b16 %v742
          %v814 = vunpack.c.l.b16 %v743
          %v815 = vunpack.c.l.b16 %v744
          %v816 = vunpack.c.l.b16 %v745
          %v817 = vunpack.c.l.b16 %v746
          %v818 = vunpack.c.l.b16 %v747
          %v819 = vunpack.c.l.b16 %v748
          %v820 = vunpack.c.l.b16 %v749
          %v821 = vunpack.c.l.b16 %v750
          %v822 = vunpack.c.l.b16 %v751
          %v823 = vunpack.c.l.b16 %v752
          %v824 = vunpack.c.l.b16 %v753
          %v825 = vunpack.c.l.b16 %v754
          %v826 = vunpack.c.l.b16 %v755
          %v827 = vunpack.c.l.b16 %v756
          %v828 = vunpack.c.l.b16 %v757
          %v829 = vunpack.c.l.b16 %v758
          %v830 = vpack.c.b16 %v799, %v798
          %v831 = vpack.c.b16 %v801, %v800
          %v832 = vpack.c.b16 %v803, %v802
          %v833 = vpack.c.b16 %v805, %v804
          %v834 = vpack.c.b16 %v807, %v806
          %v835 = vpack.c.b16 %v809, %v808
          %v836 = vpack.c.b16 %v811, %v810
          %v837 = vpack.c.b16 %v813, %v812
          %v838 = vpack.c.b16 %v815, %v814
          %v839 = vpack.c.b16 %v817, %v816
          %v840 = vpack.c.b16 %v819, %v818
          %v841 = vpack.c.b16 %v821, %v820
          %v842 = vpack.c.b16 %v823, %v822
          %v843 = vpack.c.b16 %v825, %v824
          %v844 = vpack.c.b16 %v827, %v826
          %v845 = vpack.c.b16 %v829, %v828
          %862 = vmatprep.subr.bf16.mxu0 0
          %863 = vmatpush1.bf16.msra.mxu0 %v837
          %864 = vmatprep.subr.bf16.mxu0 0
          %865 = vmatpush1.bf16.msra.mxu0 %v836
          %866 = vmatprep.subr.bf16.mxu0 0
          %867 = vmatpush1.bf16.msra.mxu0 %v835
          %868 = vmatprep.subr.bf16.mxu0 0
          %869 = vmatpush1.bf16.msra.mxu0 %v834
          %870 = vmatprep.subr.bf16.mxu0 0
          %871 = vmatpush1.bf16.msra.mxu0 %v833
          %872 = vmatprep.subr.bf16.mxu0 0
          %873 = vmatpush1.bf16.msra.mxu0 %v832
          %874 = vmatprep.subr.bf16.mxu0 0
          %875 = vmatpush1.bf16.msra.mxu0 %v831
          %876 = vmatprep.subr.bf16.mxu0 0
          %877 = vmatpush1.bf16.msra.mxu0 %v830
          %878 = vmatprep.subr.bf16.mxu0 0
          %879 = vmatpush2.bf16.msra.mxu0 %v845
          %880 = vmatprep.subr.bf16.mxu0 0
          %881 = vmatpush2.bf16.msra.mxu0 %v844
          %882 = vmatprep.subr.bf16.mxu0 0
          %883 = vmatpush2.bf16.msra.mxu0 %v843
          %884 = vmatprep.subr.bf16.mxu0 0
          %885 = vmatpush2.bf16.msra.mxu0 %v842
          %886 = vmatprep.subr.bf16.mxu0 0
          %887 = vmatpush2.bf16.msra.mxu0 %v841
          %888 = vmatprep.subr.bf16.mxu0 0
          %889 = vmatpush2.bf16.msra.mxu0 %v840
          %890 = vmatprep.subr.bf16.mxu0 0
          %891 = vmatpush2.bf16.msra.mxu0 %v839
          %892 = vmatprep.subr.bf16.mxu0 0
          %893 = vmatpush2.bf16.msra.mxu0 %v838
          %894 = vmatprep.mubr.bf16.mxu0 %v726
          %895 = vmatmul.mubr.bf16.gmra.mxu0 %v725
          %v896 = vpop.f32.mrf.mxu0
          %v897 = vadd.f32 %v764, %v896
          %v898 = vpop.f32.mrf.mxu0
          %v899 = vpop.f32.mrf.mxu0
          %v900 = vpop.f32.mrf.mxu0
          %901 = vdwg.mxu0
          %v902 = vmax.f32 %v897, 0.0
          %903 = vst [vmem:[#allocation2] sm:$0xff] %v902
        $region68: #{tpu_custom_call.1} parent=47 // pred_fallthru
          _
        %v904 = vld [vmem:[#allocation2] sm:$0xff]
        %v905 = vpack.c.bf16 %v904, %v904
        %v906 = vld [vmem:[%s336] sm:$0xf]
        %v907 = vld [vmem:[%s336 + $0x4] sm:$0xf]
        %v908 = vld [vmem:[%s336 + $0x8] sm:$0xf]
        %v909 = vld [vmem:[%s336 + $0xc] sm:$0xf]
        %v910 = vld [vmem:[%s336 + $0x10] sm:$0xf]
        %v911 = vld [vmem:[%s336 + $0x14] sm:$0xf]
        %v912 = vld [vmem:[%s336 + $0x18] sm:$0xf]
        %v913 = vld [vmem:[%s336 + $0x1c] sm:$0xf]
        %v914 = vld [vmem:[%s336 + $0x20] sm:$0xf]
        %v915 = vld [vmem:[%s336 + $0x24] sm:$0xf]
        %v916 = vld [vmem:[%s336 + $0x28] sm:$0xf]
        %v917 = vld [vmem:[%s336 + $0x2c] sm:$0xf]
        %v918 = vld [vmem:[%s336 + $0x30] sm:$0xf]
        %v919 = vld [vmem:[%s336 + $0x34] sm:$0xf]
        %v920 = vld [vmem:[%s336 + $0x38] sm:$0xf]
        %v921 = vld [vmem:[%s336 + $0x3c] sm:$0xf]
        %v922 = vld [vmem:[%s372] sm:$0x1]
        %v924 = vlaneseq
        %v925 = vshrl.u32 %v924, 7
        %v926 = vsub.s32 0, %v925
        %v927 = vrot.slane %v922, %v926
        %v945 = vunpack.c.l.b16 %v906
        %v946 = vunpack.c.l.b16 %v907
        %v947 = vunpack.c.l.b16 %v908
        %v948 = vunpack.c.l.b16 %v909
        %v949 = vunpack.c.l.b16 %v910
        %v950 = vunpack.c.l.b16 %v911
        %v951 = vunpack.c.l.b16 %v912
        %v952 = vunpack.c.l.b16 %v913
        %v953 = vunpack.c.l.b16 %v914
        %v954 = vunpack.c.l.b16 %v915
        %v955 = vunpack.c.l.b16 %v916
        %v956 = vunpack.c.l.b16 %v917
        %v957 = vunpack.c.l.b16 %v918
        %v958 = vunpack.c.l.b16 %v919
        %v959 = vunpack.c.l.b16 %v920
        %v960 = vunpack.c.l.b16 %v921
        %v961 = vpack.c.b16 %v946, %v945
        %v962 = vpack.c.b16 %v948, %v947
        %v963 = vpack.c.b16 %v950, %v949
        %v964 = vpack.c.b16 %v952, %v951
        %v965 = vpack.c.b16 %v954, %v953
        %v966 = vpack.c.b16 %v956, %v955
        %v967 = vpack.c.b16 %v958, %v957
        %v968 = vpack.c.b16 %v960, %v959
        %977 = vmatprep.subr.bf16.mxu0 0
        %978 = vmatpush1.bf16.msra.mxu0 %v968
        %979 = vmatprep.subr.bf16.mxu0 0
        %980 = vmatpush1.bf16.msra.mxu0 %v967
        %981 = vmatprep.subr.bf16.mxu0 0
        %982 = vmatpush1.bf16.msra.mxu0 %v966
        %983 = vmatprep.subr.bf16.mxu0 0
        %984 = vmatpush1.bf16.msra.mxu0 %v965
        %985 = vmatprep.subr.bf16.mxu0 0
        %986 = vmatpush1.bf16.msra.mxu0 %v964
        %987 = vmatprep.subr.bf16.mxu0 0
        %988 = vmatpush1.bf16.msra.mxu0 %v963
        %989 = vmatprep.subr.bf16.mxu0 0
        %990 = vmatpush1.bf16.msra.mxu0 %v962
        %991 = vmatprep.subr.bf16.mxu0 0
        %992 = vmatpush1.bf16.msra.mxu0 %v961
        %993 = vmatprep.subr.bf16.mxu0 0
        %994 = vmatpush2.bf16.msra.mxu0 0
        %995 = vmatprep.subr.bf16.mxu0 0
        %996 = vmatpush2.bf16.msra.mxu0 0
        %997 = vmatprep.subr.bf16.mxu0 0
        %998 = vmatpush2.bf16.msra.mxu0 0
        %999 = vmatprep.subr.bf16.mxu0 0
        %1000 = vmatpush2.bf16.msra.mxu0 0
        %1001 = vmatprep.subr.bf16.mxu0 0
        %1002 = vmatpush2.bf16.msra.mxu0 0
        %1003 = vmatprep.subr.bf16.mxu0 0
        %1004 = vmatpush2.bf16.msra.mxu0 0
        %1005 = vmatprep.subr.bf16.mxu0 0
        %1006 = vmatpush2.bf16.msra.mxu0 0
        %1007 = vmatprep.subr.bf16.mxu0 0
        %1008 = vmatpush2.bf16.msra.mxu0 0
        %1009 = vmatprep.mubr.bf16.mxu0 0
        %1010 = vmatmul.mubr.bf16.gmra.mxu0 %v905
        %v1011 = vpop.f32.mrf.mxu0
        %v1012 = vadd.f32 %v927, %v1011
        %v1013 = vpop.f32.mrf.mxu0
        %v1014 = vpop.f32.mrf.mxu0
        %v1015 = vpop.f32.mrf.mxu0
        %1016 = vdwg.mxu0
        %1017 = vst [vmem:[%s369] sm:$0xff] %v1012
        %s1018 = sand.u32 %s210, 1
        %s1019 = scalar_lea.sflag [#allocation7], %s1018
        %s1020 = sand.u32 %s210, 1
        %s1021 = smul.addr %s1020, 8
        %s1022 = scalar_lea.vmem [#allocation13], %s1021
        // Predicated region
        $region125: #{tpu_custom_call.1} parent=47 // pred_check
          %p1023 = pneg %p220
        $region126: #{tpu_custom_call.1} parent=47 // pred_check_branch
          %1025 = sbr.rel (%p1023) target = $region128
        $region127: #{tpu_custom_call.1} parent=47 // pred_region
          %s1027 = ssub.s32 128, 128
          %1028 = vsyncadd %s1019, %s1027
          %s1029 = smul.addr %s35, 2
          %s1030 = sadd.s32 %s36, %s1029
          %s1031 = smul.addr %s1030, 128
          %s1032 = scalar_lea.hbm %s8, %s1031
          %s1034 = sshll.u32 %s1022, 4
          %s1035 = int_to_ptr.vmem [resolvable:$true] %s1034
          %1037 = dma.vmem_to_hbm [thread:$0]  %s1035, 128, %s1032, %s1019
        $region128: #{tpu_custom_call.1} parent=47 // pred_fallthru
          _
      $region48: #{tpu_custom_call.1} parent=5 // pred_fallthru
        _
      %p1038 = scmp.le.s32.totalorder 2, %s26
      // Predicated region
      $region129: #{tpu_custom_call.1} parent=5 // pred_check
        %p1039 = pneg %p1038
      $region130: #{tpu_custom_call.1} parent=5 // pred_check_branch
        %1041 = sbr.rel (%p1039) target = $region132
      $region131: #{tpu_custom_call.1} parent=5 // pred_region
        %s1042 = ssub.s32 %s26, 2
        // Predicated region
        $region133: #{tpu_custom_call.1} parent=131 // pred_check
          %p1043 = pneg %p226
        $region134: #{tpu_custom_call.1} parent=131 // pred_check_branch
          %1045 = sbr.rel (%p1043) target = $region136
        $region135: #{tpu_custom_call.1} parent=131 // pred_region
          %s1046 = sand.u32 %s211, 1
          %s1047 = scalar_lea.sflag [#allocation7], %s1046
          %s1048 = sand.u32 %s211, 1
          %s1049 = smul.addr %s1048, 8
          %s1050 = scalar_lea.vmem [#allocation13], %s1049
          %1051 = dma.done %s1047, 128
        $region136: #{tpu_custom_call.1} parent=131 // pred_fallthru
          _
      $region132: #{tpu_custom_call.1} parent=5 // pred_fallthru
        _
    $region6: #{tpu_custom_call.1} parent=1 // loop_footer
      %s30 = sadd.s32 1, %s26
    $region7: #{tpu_custom_call.1} parent=1 // loop_footer_branch
      %25 = sbr.rel target = $region3
    $region8: #{tpu_custom_call.1} parent=1 // loop_exit
      _
    %1052 = vsyncpa [#allocation6], 1
    %s1053 = scalar_lea.sflag [#allocation6], 1
    %1054 = vsyncpa %s1053, 1
    %1055 = vsyncpa [#allocation9], 1
    %1056 = vsyncpa [#allocation12], 1
    %s1057 = scalar_lea.sflag [#allocation12], 1
    %1058 = vsyncpa %s1057, 1
    %1059 = vsyncpa [#allocation7], 1
    %s1060 = scalar_lea.sflag [#allocation7], 1
    %1061 = vsyncpa %s1060, 1

</llo_original>
